<compile_context>
chip_gen: v7x
topology: tpu7x:2x2x1
jax: 0.10.0
libtpu: 0.0.40
codegen_flags: <defaults>
</compile_context>

<pallas_src>
import functools

import jax
import jax.numpy as jnp
from jax import lax
from jax.experimental import pallas as pl
from jax.experimental.pallas import tpu as pltpu


def _soft_f1_partials_kernel(logits_ref, target_ref, pred_part_ref, sel_part_ref, *,
                             batch: int, tile_b: int, tiles_per_core: int,
                             needs_mask: bool, approx_recip: bool):
    c = pl.program_id(0)   # logical core (parallel axis)
    t = pl.program_id(1)   # batch tile within this core (reduction axis)

    @pl.when(t == 0)
    def _init():
        pred_part_ref[...] = jnp.zeros_like(pred_part_ref)
        sel_part_ref[...] = jnp.zeros_like(sel_part_ref)

    logits = logits_ref[...].astype(jnp.float32)              # (tile_b, C)
    tb, C = logits.shape

    if needs_mask:  # compile-time flag: only traced when the grid over-covers B
        row_start = (c * tiles_per_core + t) * tile_b
        row = lax.broadcasted_iota(jnp.int32, (tb, 1), 0) + row_start
        in_bounds = row < batch                                # (tile_b, 1)
        # padded / phantom rows may hold stale VMEM (possibly NaN/Inf):
        # select BEFORE the softmax so garbage cannot propagate.
        logits = jnp.where(in_bounds, logits, 0.0)

    # softmax over classes (lane axis); reciprocal goes to the EUP when approx.
    m = jnp.max(logits, axis=1, keepdims=True)
    e = jnp.exp(logits - m)
    denom = jnp.sum(e, axis=1, keepdims=True)
    if approx_recip:
        pred = e * pl.reciprocal(denom, approx=True)
    else:
        pred = e / denom

    if needs_mask:
        pred = jnp.where(in_bounds, pred, 0.0)                 # single row-mask

    # pred gathered at the target class via a broadcast compare against a
    # (1, C) iota (no (tb, C) int32 materialization).
    tgt = target_ref[...]                                      # (tile_b, 1) i32
    col = lax.broadcasted_iota(jnp.int32, (1, C), 1)           # (1, C)
    sel = jnp.where(col == tgt, pred, 0.0)                     # (tile_b, C)

    # Per-core running column sums, resident across the reduction axis.
    pred_part_ref[...] += jnp.sum(pred, axis=0, keepdims=True).reshape(pred_part_ref.shape)
    sel_part_ref[...] += jnp.sum(sel, axis=0, keepdims=True).reshape(sel_part_ref.shape)


def _choose_tile_b(B: int, C: int, itemsize: int, requested: int, num_cores: int) -> int:
    """Batch tile: multiple of 8 (or == B), sized against the REAL VMEM footprint
    (double-buffered native window + ~5 live (tb, C) f32 intermediates), with a
    preference for a tile that makes the grid cover B exactly (no mask path)."""
    bytes_per_row = C * (2 * itemsize + 5 * 4)
    budget = 16 * 1024 * 1024            # conservative: ok on v5e scoped default & v7x 64 MiB
    cap = max(8, budget // max(1, bytes_per_row))
    cap = min(cap, requested, B)
    if cap >= B:
        return B                          # whole array, single block
    cap = max(8, (cap // 8) * 8)          # sublane alignment
    lo = max(8, (cap // 2) // 8 * 8)
    d = cap
    while d >= lo:                        # largest tile <= cap with exact coverage
        nb = -(-B // d)
        nc = num_cores if nb >= num_cores else 1
        tpc = -(-nb // nc)
        if nc * tpc * d == B:
            return d                      # needs_mask will be False
        d -= 8
    return cap


def soft_f1_loss(logits, target, class_weights=None, *,
                 smoothing: float = 0.0, epsilon: float = 1e-7,
                 reduction: str = "mean", tile_b: int = 512,
                 num_cores: int = 2, approx_recip: bool = True):
    assert logits.ndim == 2
    assert target.ndim == 1
    assert reduction in ("sum", "mean")
    B, C = logits.shape
    assert C > 1 or smoothing == 0.0, "label smoothing requires num_classes > 1"

    if class_weights is None:
        cw = jnp.ones((1, C), dtype=jnp.float32)
    else:
        cw = jnp.asarray(class_weights, dtype=jnp.float32).reshape(1, C)

    target_i32 = target.astype(jnp.int32)
    target_2d = target_i32.reshape(B, 1)

    tb = _choose_tile_b(B, C, jnp.dtype(logits.dtype).itemsize, tile_b, num_cores)
    n_blocks = pl.cdiv(B, tb)
    n_cores = num_cores if n_blocks >= num_cores else 1
    tiles_per_core = pl.cdiv(n_blocks, n_cores)
    needs_mask = (n_cores * tiles_per_core * tb) != B          # compile-time
    phantom = (n_cores * tiles_per_core) != n_blocks           # grid over-covers blocks

    if phantom:
        # Clamp phantom block indices to the last valid block; those rows are
        # fully masked in-kernel (row_start >= B) so they contribute nothing.
        def blk_map(c, t):
            return (jnp.minimum(c * tiles_per_core + t, n_blocks - 1), 0)
    else:
        def blk_map(c, t):
            return (c * tiles_per_core + t, 0)

    kernel = functools.partial(
        _soft_f1_partials_kernel,
        batch=B, tile_b=tb, tiles_per_core=tiles_per_core,
        needs_mask=needs_mask, approx_recip=approx_recip)

    pred_part, sel_part = pl.pallas_call(
        kernel,
        out_shape=(jax.ShapeDtypeStruct((n_cores, 1, C), jnp.float32),
                   jax.ShapeDtypeStruct((n_cores, 1, C), jnp.float32)),
        grid=(n_cores, tiles_per_core),
        in_specs=[
            pl.BlockSpec((tb, C), blk_map),          # logits in NATIVE dtype
            pl.BlockSpec((tb, 1), blk_map),          # targets
        ],
        out_specs=(
            pl.BlockSpec((1, 1, C), lambda c, t: (c, 0, 0)),   # per-core colsum(pred)
            pl.BlockSpec((1, 1, C), lambda c, t: (c, 0, 0)),   # per-core colsum(onehot*pred)
        ),
        compiler_params=pltpu.CompilerParams(
            dimension_semantics=("parallel", "arbitrary"),     # cores x batch-reduction
            vmem_limit_bytes=32 * 1024 * 1024),
    )(logits, target_2d)

    # ---- finalize in the wrapper (tiny (1, C) math; depends on target only
    # through a histogram, which never touches the kernel) ----
    sum_pred = jnp.sum(pred_part, axis=0).reshape(1, C)
    sum_sel = jnp.sum(sel_part, axis=0).reshape(1, C)
    hist = jnp.zeros((C,), jnp.float32).at[target_i32].add(1.0).reshape(1, C)

    confidence = jnp.float32(1.0 - smoothing)
    off = jnp.float32(smoothing / (C - 1)) if C > 1 else jnp.float32(0.0)

    tp_u = off * sum_pred + (confidence - off) * sum_sel       # colsum(true*pred)
    true_u = off * jnp.float32(B) + (confidence - off) * hist  # colsum(true)

    tp = tp_u * cw
    fp = (sum_pred - tp_u) * cw                                # colsum((1-true)*pred)*cw
    fn = (true_u - tp_u) * cw                                  # colsum(true*(1-pred))*cw

    eps = jnp.float32(epsilon)
    precision = tp / (tp + fp + eps)
    recall = tp / (tp + fn + eps)
    f1 = 2.0 * precision * recall / (precision + recall + eps)
    f1 = jnp.clip(f1, eps, 1.0 - eps)                          # (1, C)

    if reduction == "sum":
        return 1.0 - jnp.mean(f1, axis=1)    # matches torch: 1 - f1.mean(dim=1) -> (1,)
    return 1.0 - jnp.mean(f1)                # matches torch: 1 - f1.mean() -> scalar


def _reference(logits, target, class_weights, smoothing, epsilon):
    # pure-JAX reference (mirrors the PyTorch SoftF1Loss.forward)
    B, C = logits.shape
    pred = jax.nn.softmax(logits.astype(jnp.float32), axis=1)
    off = smoothing / (C - 1) if C > 1 else 0.0
    true = jnp.full((B, C), off, dtype=jnp.float32)
    true = true.at[jnp.arange(B), target].set(1.0 - smoothing)
    cw = class_weights.reshape(1, C).astype(jnp.float32)
    tp = (true * pred).sum(axis=0) * cw
    fp = ((1 - true) * pred).sum(axis=0) * cw
    fn = (true * (1 - pred)).sum(axis=0) * cw
    precision = tp / (tp + fp + epsilon)
    recall = tp / (tp + fn + epsilon)
    f1 = 2 * precision * recall / (precision + recall + epsilon)
    f1 = jnp.clip(f1, epsilon, 1 - epsilon)
    return 1.0 - f1.mean()


if __name__ == "__main__":
    key = jax.random.PRNGKey(0)
    k1, k2 = jax.random.split(key)

    B, C = 40, 32
    smoothing = 0.1
    epsilon = 1e-7

    logits = jax.random.normal(k1, (B, C), dtype=jnp.float32)
    target = jax.random.randint(k2, (B,), 0, C, dtype=jnp.int32)
    class_weights = jnp.linspace(0.5, 1.5, C, dtype=jnp.float32).reshape(1, C)

    ref = _reference(logits, target, class_weights, smoothing, epsilon)

    # (1) multi-tile, two-logical-core grid (phantom block clamped + masked
    #     partial last tile).  Tolerance relaxed for the approx EUP reciprocal.
    loss_tiled = soft_f1_loss(logits, target, class_weights,
                              smoothing=smoothing, epsilon=epsilon,
                              reduction="mean", tile_b=16)
    loss_tiled = jax.block_until_ready(loss_tiled)
    assert jnp.allclose(loss_tiled, ref, atol=2e-3, rtol=2e-3), (loss_tiled, ref)

    # (2) whole-array single-block path (mask path not compiled in).
    loss_full = soft_f1_loss(logits, target, class_weights,
                             smoothing=smoothing, epsilon=epsilon,
                             reduction="mean")
    loss_full = jax.block_until_ready(loss_full)
    assert jnp.allclose(loss_full, ref, atol=2e-3, rtol=2e-3), (loss_full, ref)

    # (3) reduction='sum' path: shape (1,), same value since f1 is (1, C).
    loss_sum = soft_f1_loss(logits, target, class_weights,
                            smoothing=smoothing, epsilon=epsilon,
                            reduction="sum", tile_b=16)
    loss_sum = jax.block_until_ready(loss_sum)
    assert loss_sum.shape == (1,)
    assert jnp.allclose(loss_sum[0], ref, atol=2e-3, rtol=2e-3), (loss_sum, ref)

    # (4) bf16 logits stay bf16 on the wire (in-kernel f32 cast); reference is
    #     fed the same bf16-rounded values so only kernel-vs-XLA diffs remain.
    logits_bf16 = logits.astype(jnp.bfloat16)
    ref_bf16 = _reference(logits_bf16, target, class_weights, smoothing, epsilon)
    loss_bf16 = soft_f1_loss(logits_bf16, target, class_weights,
                             smoothing=smoothing, epsilon=epsilon,
                             reduction="mean", tile_b=16)
    loss_bf16 = jax.block_until_ready(loss_bf16)
    assert jnp.allclose(loss_bf16, ref_bf16, atol=2e-3, rtol=2e-3), (loss_bf16, ref_bf16)

    print("KERNEL_OK")
</pallas_src>

<mosaic_0001>
module attributes {stable_mosaic.version = 11 : i64} {
  func.func @_soft_f1_partials_kernel(%arg0: i32, %arg1: i32, %arg2: memref<16x32xf32, #tpu.memory_space<vmem>>, %arg3: memref<16x1xi32, #tpu.memory_space<vmem>>, %arg4: memref<1x1x32xf32, #tpu.memory_space<vmem>>, %arg5: memref<1x1x32xf32, #tpu.memory_space<vmem>>) attributes {dimension_semantics = [#tpu.dimension_semantics<parallel>, #tpu.dimension_semantics<arbitrary>], iteration_bounds = array<i64: 2, 2>, scalar_prefetch = 0 : i64, scratch_operands = 0 : i64, tpu.core_type = #tpu.core_type<tc>, window_params = [{transform_indices = @transform_0, window_bounds = array<i64: 16, 32>}, {transform_indices = @transform_1, window_bounds = array<i64: 16, 1>}, {transform_indices = @transform_2, window_bounds = array<i64: 1, 1, 32>}, {transform_indices = @transform_3, window_bounds = array<i64: 1, 1, 32>}]} {
    %c0_i32 = arith.constant 0 : i32
    %0 = arith.cmpi eq, %arg1, %c0_i32 : i32
    %1 = arith.extui %0 : i1 to i32
    %c0_i32_0 = arith.constant 0 : i32
    %2 = arith.cmpi ne, %1, %c0_i32_0 : i32
    scf.if %2 {
      %cst_22 = arith.constant 0.000000e+00 : f32
      %49 = vector.broadcast %cst_22 : f32 to vector<1x1x32xf32>
      %c0_23 = arith.constant 0 : index
      %c0_24 = arith.constant 0 : index
      %c0_25 = arith.constant 0 : index
      %50 = vector.load %arg4[%c0_23, %c0_24, %c0_25] : memref<1x1x32xf32, #tpu.memory_space<vmem>>, vector<1x1x32xf32>
      tpu.vector_store %arg4[%c0_23, %c0_24, %c0_25], %49 {strides = array<i32>} : memref<1x1x32xf32, #tpu.memory_space<vmem>>, vector<1x1x32xf32>,
      %cst_26 = arith.constant 0.000000e+00 : f32
      %51 = vector.broadcast %cst_26 : f32 to vector<1x1x32xf32>
      %c0_27 = arith.constant 0 : index
      %c0_28 = arith.constant 0 : index
      %c0_29 = arith.constant 0 : index
      %52 = vector.load %arg5[%c0_27, %c0_28, %c0_29] : memref<1x1x32xf32, #tpu.memory_space<vmem>>, vector<1x1x32xf32>
      tpu.vector_store %arg5[%c0_27, %c0_28, %c0_29], %51 {strides = array<i32>} : memref<1x1x32xf32, #tpu.memory_space<vmem>>, vector<1x1x32xf32>,
    } else {
    }
    %c0 = arith.constant 0 : index
    %c0_1 = arith.constant 0 : index
    %3 = vector.load %arg2[%c0, %c0_1] : memref<16x32xf32, #tpu.memory_space<vmem>>, vector<16x32xf32>
    %c2_i32 = arith.constant 2 : i32
    %4 = arith.muli %arg0, %c2_i32 : i32
    %5 = arith.addi %4, %arg1 : i32
    %c16_i32 = arith.constant 16 : i32
    %6 = arith.muli %5, %c16_i32 : i32
    %7 = tpu.iota {dimensions = array<i32: 0>} : vector<16x1xi32>
    %8 = vector.broadcast %6 : i32 to vector<16x1xi32>
    %9 = arith.addi %7, %8 : vector<16x1xi32>
    %c40_i32 = arith.constant 40 : i32
    %10 = vector.broadcast %c40_i32 : i32 to vector<16x1xi32>
    %11 = arith.cmpi slt, %9, %10 : vector<16x1xi32>
    %cst = arith.constant 0.000000e+00 : f32
    %12 = vector.shape_cast %11 : vector<16x1xi1> to vector<16x1xi1>
    %13 = vector.broadcast %12 : vector<16x1xi1> to vector<16x32xi1>
    %14 = vector.broadcast %cst : f32 to vector<16x32xf32>
    %15 = arith.select %13, %3, %14 : vector<16x32xi1>, vector<16x32xf32>
    %cst_2 = arith.constant dense<0xFF800000> : vector<16xf32>
    %16 = vector.multi_reduction <maximumf>, %15, %cst_2 [1] : vector<16x32xf32> to vector<16xf32>
    %17 = vector.shape_cast %16 : vector<16xf32> to vector<16x1xf32>
    %18 = vector.broadcast %17 : vector<16x1xf32> to vector<16x32xf32>
    %19 = arith.subf %15, %18 : vector<16x32xf32>
    %20 = math.exp %19 : vector<16x32xf32>
    %cst_3 = arith.constant dense<0.000000e+00> : vector<16xf32>
    %21 = vector.multi_reduction <add>, %20, %cst_3 [1] : vector<16x32xf32> to vector<16xf32>
    %22 = vector.shape_cast %21 : vector<16xf32> to vector<16x1xf32>
    %23 = tpu.reciprocal %22 {approx = true} : vector<16x1xf32> -> vector<16x1xf32>
    %24 = vector.broadcast %23 : vector<16x1xf32> to vector<16x32xf32>
    %25 = arith.mulf %20, %24 : vector<16x32xf32>
    %cst_4 = arith.constant 0.000000e+00 : f32
    %26 = vector.shape_cast %11 : vector<16x1xi1> to vector<16x1xi1>
    %27 = vector.broadcast %26 : vector<16x1xi1> to vector<16x32xi1>
    %28 = vector.broadcast %cst_4 : f32 to vector<16x32xf32>
    %29 = arith.select %27, %25, %28 : vector<16x32xi1>, vector<16x32xf32>
    %c0_5 = arith.constant 0 : index
    %c0_6 = arith.constant 0 : index
    %30 = vector.load %arg3[%c0_5, %c0_6] : memref<16x1xi32, #tpu.memory_space<vmem>>, vector<16x1xi32>
    %31 = tpu.iota {dimensions = array<i32: 1>} : vector<1x32xi32>
    %32 = vector.broadcast %31 : vector<1x32xi32> to vector<16x32xi32>
    %33 = vector.broadcast %30 : vector<16x1xi32> to vector<16x32xi32>
    %34 = arith.cmpi eq, %32, %33 : vector<16x32xi32>
    %cst_7 = arith.constant 0.000000e+00 : f32
    %35 = vector.broadcast %cst_7 : f32 to vector<16x32xf32>
    %36 = arith.select %34, %29, %35 : vector<16x32xi1>, vector<16x32xf32>
    %c0_8 = arith.constant 0 : index
    %c0_9 = arith.constant 0 : index
    %c0_10 = arith.constant 0 : index
    %37 = vector.load %arg4[%c0_8, %c0_9, %c0_10] : memref<1x1x32xf32, #tpu.memory_space<vmem>>, vector<1x1x32xf32>
    %cst_11 = arith.constant dense<0.000000e+00> : vector<32xf32>
    %38 = vector.multi_reduction <add>, %29, %cst_11 [0] : vector<16x32xf32> to vector<32xf32>
    %39 = vector.shape_cast %38 : vector<32xf32> to vector<1x32xf32>
    %40 = vector.shape_cast %39 : vector<1x32xf32> to vector<1x1x32xf32>
    %41 = arith.addf %37, %40 : vector<1x1x32xf32>
    %c0_12 = arith.constant 0 : index
    %c0_13 = arith.constant 0 : index
    %c0_14 = arith.constant 0 : index
    %42 = vector.load %arg4[%c0_12, %c0_13, %c0_14] : memref<1x1x32xf32, #tpu.memory_space<vmem>>, vector<1x1x32xf32>
    tpu.vector_store %arg4[%c0_12, %c0_13, %c0_14], %41 {strides = array<i32>} : memref<1x1x32xf32, #tpu.memory_space<vmem>>, vector<1x1x32xf32>,
    %c0_15 = arith.constant 0 : index
    %c0_16 = arith.constant 0 : index
    %c0_17 = arith.constant 0 : index
    %43 = vector.load %arg5[%c0_15, %c0_16, %c0_17] : memref<1x1x32xf32, #tpu.memory_space<vmem>>, vector<1x1x32xf32>
    %cst_18 = arith.constant dense<0.000000e+00> : vector<32xf32>
    %44 = vector.multi_reduction <add>, %36, %cst_18 [0] : vector<16x32xf32> to vector<32xf32>
    %45 = vector.shape_cast %44 : vector<32xf32> to vector<1x32xf32>
    %46 = vector.shape_cast %45 : vector<1x32xf32> to vector<1x1x32xf32>
    %47 = arith.addf %43, %46 : vector<1x1x32xf32>
    %c0_19 = arith.constant 0 : index
    %c0_20 = arith.constant 0 : index
    %c0_21 = arith.constant 0 : index
    %48 = vector.load %arg5[%c0_19, %c0_20, %c0_21] : memref<1x1x32xf32, #tpu.memory_space<vmem>>, vector<1x1x32xf32>
    tpu.vector_store %arg5[%c0_19, %c0_20, %c0_21], %47 {strides = array<i32>} : memref<1x1x32xf32, #tpu.memory_space<vmem>>, vector<1x1x32xf32>,
    return
  }
  func.func @transform_0(%arg0: i32, %arg1: i32) -> (i32, i32) {
    %c2_i32 = arith.constant 2 : i32
    %0 = arith.muli %arg0, %c2_i32 : i32
    %1 = arith.addi %0, %arg1 : i32
    %c2_i32_0 = arith.constant 2 : i32
    %2 = arith.minsi %1, %c2_i32_0 : i32
    %c0_i32 = arith.constant 0 : i32
    %c0_i32_1 = arith.constant 0 : i32
    return %2, %c0_i32 : i32, i32
  }
  func.func @transform_1(%arg0: i32, %arg1: i32) -> (i32, i32) {
    %c2_i32 = arith.constant 2 : i32
    %0 = arith.muli %arg0, %c2_i32 : i32
    %1 = arith.addi %0, %arg1 : i32
    %c2_i32_0 = arith.constant 2 : i32
    %2 = arith.minsi %1, %c2_i32_0 : i32
    %c0_i32 = arith.constant 0 : i32
    %c0_i32_1 = arith.constant 0 : i32
    return %2, %c0_i32 : i32, i32
  }
  func.func @transform_2(%arg0: i32, %arg1: i32) -> (i32, i32, i32) {
    %c0_i32 = arith.constant 0 : i32
    %c0_i32_0 = arith.constant 0 : i32
    %c0_i32_1 = arith.constant 0 : i32
    return %arg0, %c0_i32, %c0_i32_0 : i32, i32, i32
  }
  func.func @transform_3(%arg0: i32, %arg1: i32) -> (i32, i32, i32) {
    %c0_i32 = arith.constant 0 : i32
    %c0_i32_0 = arith.constant 0 : i32
    %c0_i32_1 = arith.constant 0 : i32
    return %arg0, %c0_i32, %c0_i32_0 : i32, i32, i32
  }
}

</mosaic_0001>

<llo_original>
// kernel: tpu_custom_call.1
$region0: #{tpu_custom_call.1}
  #allocation0 [shape = 'u32[]', space=smem, size = 0x4, offset = 0x4, fixed_abs, tag = 'smem constant byte address 0x4 - core index']
  #allocation1 [shape = 'u32[144,128]{1,0:T(1,128)}', space=vmem, size = 0x12000, scoped, tag = 'internal scratch']
  %s0 = inlined_call_operand.vmem [shape: f32[40,32], index: 0, kind: input, shape index: {}]
  %s1 = inlined_call_operand.vmem [shape: s32[40,1], index: 1, kind: input, shape index: {}]
  %s2 = inlined_call_operand.hbm [shape: f32[2,1,32], index: 2, kind: output, shape index: {0}]
  %s3 = inlined_call_operand.hbm [shape: f32[2,1,32], index: 3, kind: output, shape index: {1}]
  %4 = xla_tuple %s2, %s3
  %s5 = sld [smem:[#allocation0]]
  $region53: #{tpu_custom_call.1} parent=0
    _
  %s7 = ssub.s32 1, %s5
  %s8 = scalar_select 0, %s7, %s5
  $region1: #{tpu_custom_call.1} parent=0
    #allocation2 [shape = 'u8[1024]{0}', space=vmem, size = 0x400, scoped, tag = 'output window, operand 0']
    #allocation3 [shape = 's32[2]{0}', space=sflag, size = 0x8, scoped, tag = 'scoped memory for tpu_custom_call.1']
    #allocation4 [shape = 'u8[1024]{0}', space=vmem, size = 0x400, scoped, tag = 'output window, operand 1']
    #allocation5 [shape = 's32[2]{0}', space=sflag, size = 0x8, scoped, tag = 'scoped memory for tpu_custom_call.1']
    %9 = vsyncpa [#allocation3], 0
    %s10 = scalar_lea.sflag [#allocation3], 1
    %11 = vsyncpa %s10, 0
    %12 = vsyncpa [#allocation5], 0
    %s13 = scalar_lea.sflag [#allocation5], 1
    %14 = vsyncpa %s13, 0
    loop: start=0, step=1, limit=6
    $region2: #{tpu_custom_call.1} parent=1 // loop_pre_header
      _
    $region3: #{tpu_custom_call.1} parent=1 // loop_header
      %s16 = sphi 0, %s20
      %p17 = scmp.ge.s32.totalorder %s16, 6
      %s23 = sphi 0, %s35
      %s24 = sphi 0, %s31
      %s25 = sphi 0, %s23
      %s26 = sphi 0, %s24
      %s27 = sphi 0, %s25
      %s28 = sphi 0, %s26
      %s46 = sphi 0, %s48
      %s49 = sphi 0, %s46
      %s50 = sphi 0, %s49
      %s66 = sphi 0, %s50
      %s80 = sphi 0, %s82
      %s83 = sphi 0, %s80
      %s84 = sphi 0, %s83
      %s100 = sphi 0, %s84
      %s106 = sphi 0, %s108
      %s109 = sphi 0, %s106
      %s110 = sphi 0, %s109
      %s126 = sphi 0, %s110
      %s132 = sphi 0, %s134
      %s135 = sphi 0, %s132
      %s136 = sphi 0, %s135
      %s152 = sphi 0, %s136
    $region4: #{tpu_custom_call.1} parent=1 // loop_header_branch
      %19 = sbr.rel (%p17) target = $region8
    $region5: #{tpu_custom_call.1} parent=1 // loop_body
      %s21 = ssub.s32 %s16, 1
      %s22 = ssub.s32 %s16, 2
      %s29 = sadd.s32 1, %s24
      %p30 = scmp.ge.s32.totalorder %s29, 2
      %s31 = scalar_select %p30, 0, %s29
      %s32 = sadd.s32 1, %s23
      %s33 = scalar_select %p30, %s32, %s23
      %p34 = scmp.ge.s32.totalorder %s33, 2
      %s35 = scalar_select %p34, 0, %s33
      %s36 = smul.u32 %s23, 2
      %s37 = sadd.s32 %s36, %s24
      %p38 = scmp.lt.s32.totalorder %s37, 2
      %s39 = scalar_select %p38, %s37, 2
      %s40 = smul.u32 %s35, 2
      %s41 = sadd.s32 %s40, %s31
      %p42 = scmp.lt.s32.totalorder %s41, 2
      %s43 = scalar_select %p42, %s41, 2
      %s44 = ssub.s32 %s39, %s43
      %p45 = scmp.eq.s32.totalorder %s44, 0
      %s47 = sadd.s32 %s46, 1
      %s48 = scalar_select %p45, %s46, %s47
      %p51 = pneg %p45
      %p52 = scmp.eq.s32.totalorder %s16, 3
      %p53 = por %p51, %p52
      %p54 = scmp.ne.s32.totalorder %s46, %s49
      %p55 = scmp.eq.s32.totalorder %s16, 0
      %p56 = por %p54, %p55
      %p57 = scmp.ne.s32.totalorder %s46, %s49
      %p58 = scmp.eq.s32.totalorder %s21, 3
      %p59 = por %p57, %p58
      %p60 = scmp.ne.s32.totalorder %s49, %s50
      %p61 = scmp.eq.s32.totalorder %s21, 0
      %p62 = por %p60, %p61
      %p63 = scmp.ne.s32.totalorder %s49, %s50
      %p64 = scmp.eq.s32.totalorder %s22, 3
      %p65 = por %p63, %p64
      %p67 = scmp.ne.s32.totalorder %s50, %s66
      %p68 = scmp.eq.s32.totalorder %s22, 0
      %p69 = por %p67, %p68
      %s70 = smul.u32 %s23, 2
      %s71 = sadd.s32 %s70, %s24
      %p72 = scmp.lt.s32.totalorder %s71, 2
      %s73 = scalar_select %p72, %s71, 2
      %s74 = smul.u32 %s35, 2
      %s75 = sadd.s32 %s74, %s31
      %p76 = scmp.lt.s32.totalorder %s75, 2
      %s77 = scalar_select %p76, %s75, 2
      %s78 = ssub.s32 %s73, %s77
      %p79 = scmp.eq.s32.totalorder %s78, 0
      %s81 = sadd.s32 %s80, 1
      %s82 = scalar_select %p79, %s80, %s81
      %p85 = pneg %p79
      %p86 = scmp.eq.s32.totalorder %s16, 3
      %p87 = por %p85, %p86
      %p88 = scmp.ne.s32.totalorder %s80, %s83
      %p89 = scmp.eq.s32.totalorder %s16, 0
      %p90 = por %p88, %p89
      %p91 = scmp.ne.s32.totalorder %s80, %s83
      %p92 = scmp.eq.s32.totalorder %s21, 3
      %p93 = por %p91, %p92
      %p94 = scmp.ne.s32.totalorder %s83, %s84
      %p95 = scmp.eq.s32.totalorder %s21, 0
      %p96 = por %p94, %p95
      %p97 = scmp.ne.s32.totalorder %s83, %s84
      %p98 = scmp.eq.s32.totalorder %s22, 3
      %p99 = por %p97, %p98
      %p101 = scmp.ne.s32.totalorder %s84, %s100
      %p102 = scmp.eq.s32.totalorder %s22, 0
      %p103 = por %p101, %p102
      %s104 = ssub.s32 %s23, %s35
      %p105 = scmp.eq.s32.totalorder %s104, 0
      %s107 = sadd.s32 %s106, 1
      %s108 = scalar_select %p105, %s106, %s107
      %p111 = pneg %p105
      %p112 = scmp.eq.s32.totalorder %s16, 3
      %p113 = por %p111, %p112
      %p114 = scmp.ne.s32.totalorder %s106, %s109
      %p115 = scmp.eq.s32.totalorder %s16, 0
      %p116 = por %p114, %p115
      %p117 = scmp.ne.s32.totalorder %s106, %s109
      %p118 = scmp.eq.s32.totalorder %s21, 3
      %p119 = por %p117, %p118
      %p120 = scmp.ne.s32.totalorder %s109, %s110
      %p121 = scmp.eq.s32.totalorder %s21, 0
      %p122 = por %p120, %p121
      %p123 = scmp.ne.s32.totalorder %s109, %s110
      %p124 = scmp.eq.s32.totalorder %s22, 3
      %p125 = por %p123, %p124
      %p127 = scmp.ne.s32.totalorder %s110, %s126
      %p128 = scmp.eq.s32.totalorder %s22, 0
      %p129 = por %p127, %p128
      %s130 = ssub.s32 %s23, %s35
      %p131 = scmp.eq.s32.totalorder %s130, 0
      %s133 = sadd.s32 %s132, 1
      %s134 = scalar_select %p131, %s132, %s133
      %p137 = pneg %p131
      %p138 = scmp.eq.s32.totalorder %s16, 3
      %p139 = por %p137, %p138
      %p140 = scmp.ne.s32.totalorder %s132, %s135
      %p141 = scmp.eq.s32.totalorder %s16, 0
      %p142 = por %p140, %p141
      %p143 = scmp.ne.s32.totalorder %s132, %s135
      %p144 = scmp.eq.s32.totalorder %s21, 3
      %p145 = por %p143, %p144
      %p146 = scmp.ne.s32.totalorder %s135, %s136
      %p147 = scmp.eq.s32.totalorder %s21, 0
      %p148 = por %p146, %p147
      %p149 = scmp.ne.s32.totalorder %s135, %s136
      %p150 = scmp.eq.s32.totalorder %s22, 3
      %p151 = por %p149, %p150
      %p153 = scmp.ne.s32.totalorder %s136, %s152
      %p154 = scmp.eq.s32.totalorder %s22, 0
      %p155 = por %p153, %p154
      %p156 = scmp.le.s32.totalorder 1, %s16
      %p157 = scmp.lt.s32.totalorder %s16, 5
      %p158 = pnand %p156, %p157
      %p159 = pneg %p158
      // Predicated region
      $region9: #{tpu_custom_call.1} parent=5 // pred_check
        _
      $region10: #{tpu_custom_call.1} parent=5 // pred_check_branch
        %161 = sbr.rel (%p158) target = $region12
      $region11: #{tpu_custom_call.1} parent=5 // pred_region
        %s162 = ssub.s32 %s16, 1
      $region12: #{tpu_custom_call.1} parent=5 // pred_fallthru
        _
      %p163 = scmp.lt.s32.totalorder %s16, 4
      // Predicated region
      $region13: #{tpu_custom_call.1} parent=5 // pred_check
        %p164 = pneg %p163
      $region14: #{tpu_custom_call.1} parent=5 // pred_check_branch
        %166 = sbr.rel (%p164) target = $region16
      $region15: #{tpu_custom_call.1} parent=5 // pred_region
        // Predicated region
        $region17: #{tpu_custom_call.1} parent=15 // pred_check
          %p167 = pneg %p56
        $region18: #{tpu_custom_call.1} parent=15 // pred_check_branch
          %169 = sbr.rel (%p167) target = $region20
        $region19: #{tpu_custom_call.1} parent=15 // pred_region
          %s170 = smul.u32 %s23, 2
          %s171 = sadd.s32 %s170, %s24
          %p172 = scmp.lt.s32.totalorder %s171, 2
          %s173 = scalar_select %p172, %s171, 2
          %s174 = smul.u32 2, %s173
          %s175 = ssub.s32 5, %s174
          %p176 = scmp.lt.s32.totalorder %s175, 2
          %s177 = scalar_select %p176, %s175, 2
          %s178 = smul.u32 128, %s177
          %p179 = scmp.lt.s32.totalorder %s174, 4
          %s180 = scalar_select %p179, %s174, 4
          %s181 = smul.addr %s180, 8
          %s182 = scalar_lea.vmem %s0, %s181
          %s183 = smul.u32 %s23, 2
          %s184 = sadd.s32 %s183, %s24
          %p185 = scmp.lt.s32.totalorder %s184, 2
          %s186 = scalar_select %p185, %s184, 2
          %s187 = smul.u32 2, %s186
          %s188 = ssub.s32 5, %s187
          %p189 = scmp.lt.s32.totalorder %s188, 2
          %s190 = scalar_select %p189, %s188, 2
          %s191 = smul.u32 128, %s190
        $region20: #{tpu_custom_call.1} parent=15 // pred_fallthru
          _
        // Predicated region
        $region21: #{tpu_custom_call.1} parent=15 // pred_check
          %p192 = pneg %p90
        $region22: #{tpu_custom_call.1} parent=15 // pred_check_branch
          %194 = sbr.rel (%p192) target = $region24
        $region23: #{tpu_custom_call.1} parent=15 // pred_region
          %s195 = smul.u32 %s23, 2
          %s196 = sadd.s32 %s195, %s24
          %p197 = scmp.lt.s32.totalorder %s196, 2
          %s198 = scalar_select %p197, %s196, 2
          %s199 = smul.u32 2, %s198
          %s200 = ssub.s32 5, %s199
          %p201 = scmp.lt.s32.totalorder %s200, 2
          %s202 = scalar_select %p201, %s200, 2
          %s203 = smul.u32 128, %s202
          %p204 = scmp.lt.s32.totalorder %s199, 4
          %s205 = scalar_select %p204, %s199, 4
          %s206 = smul.addr %s205, 8
          %s207 = scalar_lea.vmem %s1, %s206
          %s208 = smul.u32 %s23, 2
          %s209 = sadd.s32 %s208, %s24
          %p210 = scmp.lt.s32.totalorder %s209, 2
          %s211 = scalar_select %p210, %s209, 2
          %s212 = smul.u32 2, %s211
          %s213 = ssub.s32 5, %s212
          %p214 = scmp.lt.s32.totalorder %s213, 2
          %s215 = scalar_select %p214, %s213, 2
          %s216 = smul.u32 128, %s215
        $region24: #{tpu_custom_call.1} parent=15 // pred_fallthru
          _
      $region16: #{tpu_custom_call.1} parent=5 // pred_fallthru
        _
      %p217 = scmp.le.s32.totalorder 1, %s16
      %p218 = scmp.lt.s32.totalorder %s16, 5
      %p219 = pnand %p217, %p218
      %p220 = pneg %p219
      // Predicated region
      $region25: #{tpu_custom_call.1} parent=5 // pred_check
        _
      $region26: #{tpu_custom_call.1} parent=5 // pred_check_branch
        %222 = sbr.rel (%p219) target = $region28
      $region27: #{tpu_custom_call.1} parent=5 // pred_region
        %s223 = ssub.s32 %s16, 1
        %s224 = smul.u32 %s25, 2
        %s225 = sadd.s32 %s224, %s26
        %p226 = scmp.lt.s32.totalorder %s225, 2
        %s227 = scalar_select %p226, %s225, 2
        %s228 = smul.u32 2, %s227
        %s229 = ssub.s32 5, %s228
        %p230 = scmp.lt.s32.totalorder %s229, 2
        %s231 = scalar_select %p230, %s229, 2
        %s232 = smul.u32 128, %s231
        %p233 = scmp.lt.s32.totalorder %s228, 4
        %s234 = scalar_select %p233, %s228, 4
        %s235 = smul.addr %s234, 8
        %s236 = scalar_lea.vmem %s0, %s235
        %p237 = pneg %p62
        %p238 = pneg %p59
        %s239 = smul.u32 %s25, 2
        %s240 = sadd.s32 %s239, %s26
        %p241 = scmp.lt.s32.totalorder %s240, 2
        %s242 = scalar_select %p241, %s240, 2
        %s243 = smul.u32 2, %s242
        %s244 = ssub.s32 5, %s243
        %p245 = scmp.lt.s32.totalorder %s244, 2
        %s246 = scalar_select %p245, %s244, 2
        %s247 = smul.u32 128, %s246
        %p248 = scmp.lt.s32.totalorder %s243, 4
        %s249 = scalar_select %p248, %s243, 4
        %s250 = smul.addr %s249, 8
        %s251 = scalar_lea.vmem %s1, %s250
        %p252 = pneg %p96
        %p253 = pneg %p93
        %p254 = pneg %p122
        %p255 = pneg %p119
        %s256 = sand.u32 %s109, 1
        %s257 = scalar_lea.sflag [#allocation3], %s256
        %s258 = sand.u32 %s109, 1
        %s259 = scalar_lea.vmem [#allocation2], %s258
        %p260 = pneg %p148
        %p261 = pneg %p145
        %s262 = sand.u32 %s135, 1
        %s263 = scalar_lea.sflag [#allocation5], %s262
        %s264 = sand.u32 %s135, 1
        %s265 = scalar_lea.vmem [#allocation4], %s264
        %s266 = smul.u32 %s25, 2
        %s267 = sadd.s32 %s266, %s26
        %p268 = scmp.lt.s32.totalorder %s267, 2
        %s269 = scalar_select %p268, %s267, 2
        %s270 = smul.u32 2, %s269
        %s271 = ssub.s32 5, %s270
        %p272 = scmp.lt.s32.totalorder %s271, 2
        %s273 = scalar_select %p272, %s271, 2
        %s274 = smul.u32 128, %s273
        %p275 = scmp.lt.s32.totalorder %s270, 4
        %s276 = scalar_select %p275, %s270, 4
        %s277 = smul.addr %s276, 8
        %s278 = scalar_lea.vmem %s0, %s277
        %s279 = smul.u32 %s25, 2
        %s280 = sadd.s32 %s279, %s26
        %p281 = scmp.lt.s32.totalorder %s280, 2
        %s282 = scalar_select %p281, %s280, 2
        %s283 = smul.u32 2, %s282
        %s284 = ssub.s32 5, %s283
        %p285 = scmp.lt.s32.totalorder %s284, 2
        %s286 = scalar_select %p285, %s284, 2
        %s287 = smul.u32 128, %s286
        %s288 = smul.u32 %s25, 2
        %s289 = sadd.s32 %s288, %s26
        %p290 = scmp.lt.s32.totalorder %s289, 2
        %s291 = scalar_select %p290, %s289, 2
        %s292 = smul.u32 2, %s291
        %s293 = ssub.s32 5, %s292
        %p294 = scmp.lt.s32.totalorder %s293, 2
        %s295 = scalar_select %p294, %s293, 2
        %s296 = smul.u32 128, %s295
        %p297 = scmp.lt.s32.totalorder %s292, 4
        %s298 = scalar_select %p297, %s292, 4
        %s299 = smul.addr %s298, 8
        %s300 = scalar_lea.vmem %s1, %s299
        %s301 = smul.u32 %s25, 2
        %s302 = sadd.s32 %s301, %s26
        %p303 = scmp.lt.s32.totalorder %s302, 2
        %s304 = scalar_select %p303, %s302, 2
        %s305 = smul.u32 2, %s304
        %s306 = ssub.s32 5, %s305
        %p307 = scmp.lt.s32.totalorder %s306, 2
        %s308 = scalar_select %p307, %s306, 2
        %s309 = smul.u32 128, %s308
        %p310 = scmp.eq.s32.totalorder %s26, 0
        // Predicated region
        $region29: #{tpu_custom_call.1} parent=27 // pred_check
          %p311 = pneg %p310
        $region30: #{tpu_custom_call.1} parent=27 // pred_check_branch
          %313 = sbr.rel (%p311) target = $region32
        $region31: #{tpu_custom_call.1} parent=27 // pred_region
          %vm314 = vcmask 253952
          %315 = vst.msk [vmem:[%s259] sm:$0x1] %vm314, 0.0
          %316 = vst.msk [vmem:[%s265] sm:$0x1] %vm314, 0.0
        $region32: #{tpu_custom_call.1} parent=27 // pred_fallthru
          _
        %v317 = vld [vmem:[%s278] sm:$0xff]
        %v318 = vld [vmem:[%s278 + $0x8] sm:$0xff]
        %s319 = smul.u32 %s25, 2
        %s320 = sadd.s32 %s319, %s26
        %s321 = smul.u32 %s320, 16
        %v322 = vlaneseq
        %v323 = vshrl.u32 %v322, 7
        %v324 = vadd.s32 %v323, 8
        %v325 = vstv %s321
        %v326 = vadd.s32 %v323, %v325
        %v327 = vadd.s32 %v324, %v325
        %vm328 = vcmp.lt.s32.totalorder %v326, 40
        %vm329 = vcmp.lt.s32.totalorder %v327, 40
        %v330 = vsel %vm328, 1, 0
        %v331 = vsel %vm329, 1, 0
        %vm332 = vcmp.eq.s32.totalorder %v330, 1
        %vm333 = vcmp.eq.s32.totalorder %v331, 1
        %v334 = vsel %vm332, %v317, 0.0
        %v335 = vsel %vm333, %v318, 0.0
        %vm336 = vcmask 261120
        %v337 = vsel %vm336, %v334, -inf
        %338 = vmax.xlane.f32.xlu0 %v337
        %v339 = vpop.xlane.xlu0 %338
        %v340 = vsel %vm336, %v335, -inf
        %341 = vmax.xlane.f32.xlu0 %v340
        %v342 = vpop.xlane.xlu0 %341
        %v343 = vsub.f32 %v334, %v339
        %v344 = vsub.f32 %v335, %v342
        %v345 = vmul.f32 %v343, 1.442695
        %v346 = vpow.pop %v345
        %v347 = vmul.f32 %v344, 1.442695
        %v348 = vpow.pop %v347
        %v349 = vsel %vm336, %v346, 0.0
        %350 = vadd.xlane.f32.xlu0 %v349
        %v351 = vpop.xlane.xlu0 %350
        %v352 = vsel %vm336, %v348, 0.0
        %353 = vadd.xlane.f32.xlu0 %v352
        %v354 = vpop.xlane.xlu0 %353
        %v355 = vrcp.pop %v351
        %v356 = vrcp.pop %v354
        %v357 = vmul.f32 %v346, %v355
        %v358 = vmul.f32 %v348, %v356
        %v359 = vsel %vm332, %v357, 0.0
        %v360 = vsel %vm333, %v358, 0.0
        %v361 = vld [vmem:[%s300] sm:$0xff]
        %v362 = vld [vmem:[%s300 + $0x8] sm:$0xff]
        %v363 = vlaneseq
        %v364 = vand.u32 %v363, 127
        %365 = vset.pattern.permute.xlu0 0
        %366 = vperm.xlu0 %365, %v361
        %v367 = vpop.permute.xlu0 %366
        %368 = vset.pattern.permute.xlu0 0
        %369 = vperm.xlu0 %368, %v362
        %v370 = vpop.permute.xlu0 %369
        %vm371 = vcmp.eq.s32.totalorder %v364, %v367
        %vm372 = vcmp.eq.s32.totalorder %v364, %v370
        %v373 = vsel %vm371, %v359, 0.0
        %v374 = vsel %vm372, %v360, 0.0
        %v375 = vld [vmem:[%s259] sm:$0x1]
        %v376 = vsel %vm336, %v359, 0.0
        %v377 = vsel %vm336, %v360, 0.0
        %v378 = vadd.f32 %v376, %v377
        %v379 = vrot.slane %v378, 4
        %v380 = vadd.f32 %v378, %v379
        %v381 = vrot.slane %v380, 2
        %v382 = vadd.f32 %v380, %v381
        %v383 = vrot.slane %v382, 1
        %v384 = vadd.f32 %v382, %v383
        %v385 = vadd.f32 %v375, %v384
        %vm386 = vcmask 253952
        %387 = vst.msk [vmem:[%s259] sm:$0x1] %vm386, %v385
        %v388 = vld [vmem:[%s265] sm:$0x1]
        %v389 = vsel %vm336, %v373, 0.0
        %v390 = vsel %vm336, %v374, 0.0
        %v391 = vadd.f32 %v389, %v390
        %v392 = vrot.slane %v391, 4
        %v393 = vadd.f32 %v391, %v392
        %v394 = vrot.slane %v393, 2
        %v395 = vadd.f32 %v393, %v394
        %v396 = vrot.slane %v395, 1
        %v397 = vadd.f32 %v395, %v396
        %v398 = vadd.f32 %v388, %v397
        %399 = vst.msk [vmem:[%s265] sm:$0x1] %vm386, %v398
        %s400 = sand.u32 %s109, 1
        %s401 = scalar_lea.sflag [#allocation3], %s400
        %s402 = sand.u32 %s109, 1
        %s403 = scalar_lea.vmem [#allocation2], %s402
        %s404 = sand.u32 %s135, 1
        %s405 = scalar_lea.sflag [#allocation5], %s404
        %s406 = sand.u32 %s135, 1
        %s407 = scalar_lea.vmem [#allocation4], %s406
        // Predicated region
        $region33: #{tpu_custom_call.1} parent=27 // pred_check
          %p408 = pneg %p119
        $region34: #{tpu_custom_call.1} parent=27 // pred_check_branch
          %410 = sbr.rel (%p408) target = $region36
        $region35: #{tpu_custom_call.1} parent=27 // pred_region
          %s412 = ssub.s32 16, 16
          %413 = vsyncadd %s401, %s412
          %s414 = smul.addr %s25, 16
          %s415 = scalar_lea.hbm %s2, %s414
          %s417 = sshll.u32 %s403, 4
          %s418 = int_to_ptr.vmem [resolvable:$true] %s417
          %420 = dma.vmem_to_hbm [thread:$0]  %s418, 16, %s415, %s401
        $region36: #{tpu_custom_call.1} parent=27 // pred_fallthru
          _
        // Predicated region
        $region37: #{tpu_custom_call.1} parent=27 // pred_check
          %p421 = pneg %p145
        $region38: #{tpu_custom_call.1} parent=27 // pred_check_branch
          %423 = sbr.rel (%p421) target = $region40
        $region39: #{tpu_custom_call.1} parent=27 // pred_region
          %s425 = ssub.s32 16, 16
          %426 = vsyncadd %s405, %s425
          %s427 = smul.addr %s25, 16
          %s428 = scalar_lea.hbm %s3, %s427
          %s430 = sshll.u32 %s407, 4
          %s431 = int_to_ptr.vmem [resolvable:$true] %s430
          %433 = dma.vmem_to_hbm [thread:$0]  %s431, 16, %s428, %s405
        $region40: #{tpu_custom_call.1} parent=27 // pred_fallthru
          _
      $region28: #{tpu_custom_call.1} parent=5 // pred_fallthru
        _
      %p434 = scmp.le.s32.totalorder 2, %s16
      // Predicated region
      $region41: #{tpu_custom_call.1} parent=5 // pred_check
        %p435 = pneg %p434
      $region42: #{tpu_custom_call.1} parent=5 // pred_check_branch
        %437 = sbr.rel (%p435) target = $region44
      $region43: #{tpu_custom_call.1} parent=5 // pred_region
        %s438 = ssub.s32 %s16, 2
        // Predicated region
        $region45: #{tpu_custom_call.1} parent=43 // pred_check
          %p439 = pneg %p125
        $region46: #{tpu_custom_call.1} parent=43 // pred_check_branch
          %441 = sbr.rel (%p439) target = $region48
        $region47: #{tpu_custom_call.1} parent=43 // pred_region
          %s442 = sand.u32 %s110, 1
          %s443 = scalar_lea.sflag [#allocation3], %s442
          %s444 = sand.u32 %s110, 1
          %s445 = scalar_lea.vmem [#allocation2], %s444
          %446 = dma.done %s443, 16
        $region48: #{tpu_custom_call.1} parent=43 // pred_fallthru
          _
        // Predicated region
        $region49: #{tpu_custom_call.1} parent=43 // pred_check
          %p447 = pneg %p151
        $region50: #{tpu_custom_call.1} parent=43 // pred_check_branch
          %449 = sbr.rel (%p447) target = $region52
        $region51: #{tpu_custom_call.1} parent=43 // pred_region
          %s450 = sand.u32 %s136, 1
          %s451 = scalar_lea.sflag [#allocation5], %s450
          %s452 = sand.u32 %s136, 1
          %s453 = scalar_lea.vmem [#allocation4], %s452
          %454 = dma.done %s451, 16
        $region52: #{tpu_custom_call.1} parent=43 // pred_fallthru
          _
      $region44: #{tpu_custom_call.1} parent=5 // pred_fallthru
        _
    $region6: #{tpu_custom_call.1} parent=1 // loop_footer
      %s20 = sadd.s32 1, %s16
    $region7: #{tpu_custom_call.1} parent=1 // loop_footer_branch
      %15 = sbr.rel target = $region3
    $region8: #{tpu_custom_call.1} parent=1 // loop_exit
      _
    %455 = vsyncpa [#allocation3], 1
    %s456 = scalar_lea.sflag [#allocation3], 1
    %457 = vsyncpa %s456, 1
    %458 = vsyncpa [#allocation5], 1
    %s459 = scalar_lea.sflag [#allocation5], 1
    %460 = vsyncpa %s459, 1

</llo_original>
